<compile_context>
chip_gen: v7x
topology: tpu7x:2x2x1
jax: 0.10.0
libtpu: 0.0.40
codegen_flags: <defaults>
</compile_context>

<pallas_src>
import jax
import jax.numpy as jnp
from jax.experimental import pallas as pl
from jax.experimental.pallas import tpu as pltpu

FEAT = 512          # ensemble feature width (both models emit 512-d)
NUM_CLASSES = 33    # fc output
NC_PAD = 128        # lane-dense padded logit width
TK = 512            # K tile (multiple of 128; fits all TPU generations)


def ensemble_kernel(x_ref, wsum_ref, bsum_ref, wfc_ref, bfc_ref, o_ref, acc_ref):
    # x_ref:    (B, TK)        bf16 input K-tile
    # wsum_ref: (TK, FEAT)     bf16 folded weight K-tile  (w1 + w2)
    # bsum_ref: (1, FEAT)      f32 folded bias            (b1 + b2)
    # wfc_ref:  (FEAT, NC_PAD) f32 fc weight (zero-padded to 128 lanes)
    # bfc_ref:  (1, NC_PAD)    f32 fc bias   (zero-padded)
    # o_ref:    (B, NC_PAD)    f32 padded logits
    # acc_ref:  (B, FEAT)      f32 feature accumulator (scratch)
    k = pl.program_id(0)

    @pl.when(k == 0)
    def _():
        acc_ref[...] = jnp.zeros_like(acc_ref)

    # Fused feature matmul, K-tiled:  acc += x_tile @ (w1 + w2)_tile
    acc_ref[...] += jnp.dot(
        x_ref[...], wsum_ref[...], preferred_element_type=jnp.float32
    )

    @pl.when(k == pl.num_programs(0) - 1)
    def _():
        # feats == (x@w1 + b1) + (x@w2 + b2)   (torch.add of the two models)
        feats = acc_ref[...] + bsum_ref[...]
        # self.fc(feats)
        out = jnp.dot(feats, wfc_ref[...], preferred_element_type=jnp.float32)
        o_ref[...] = (out + bfc_ref[...]).astype(o_ref.dtype)


def ensemble_forward(x_nchw, params):
    B = x_nchw.shape[0]
    F = x_nchw.shape[1] * x_nchw.shape[2] * x_nchw.shape[3]
    x_flat = x_nchw.reshape(B, F)                    # glue: NCHW -> (B, C*H*W)

    w1, b1, w2, b2, wfc, bfc = params

    # ---- algebraic fold + narrow weight dtype (plain XLA, once per call) ----
    wsum = (w1 + w2).astype(jnp.bfloat16)            # (F, 512) bf16 stream
    bsum = (b1 + b2).astype(jnp.float32)             # (1, 512)

    # ---- lane-dense logits: pad fc to 128 output lanes, slice afterwards ----
    wfc_p = jnp.zeros((FEAT, NC_PAD), jnp.float32).at[:, :NUM_CLASSES].set(wfc)
    bfc_p = jnp.zeros((1, NC_PAD), jnp.float32).at[:, :NUM_CLASSES].set(bfc)

    # ---- zero-pad the contraction axis to a multiple of the K tile ----------
    n_k = pl.cdiv(F, TK)
    kpad = n_k * TK
    x_bf = x_flat.astype(jnp.bfloat16)
    if kpad != F:
        x_bf = jnp.pad(x_bf, ((0, 0), (0, kpad - F)))
        wsum = jnp.pad(wsum, ((0, kpad - F), (0, 0)))

    out_pad = pl.pallas_call(
        ensemble_kernel,
        out_shape=jax.ShapeDtypeStruct((B, NC_PAD), jnp.float32),
        grid_spec=pltpu.PrefetchScalarGridSpec(
            num_scalar_prefetch=0,
            grid=(n_k,),
            in_specs=[
                pl.BlockSpec((B, TK), lambda k: (0, k)),        # x K-tile
                pl.BlockSpec((TK, FEAT), lambda k: (k, 0)),     # wsum K-tile
                pl.BlockSpec((1, FEAT), lambda k: (0, 0)),      # bsum (resident)
                pl.BlockSpec((FEAT, NC_PAD), lambda k: (0, 0)),  # wfc (resident)
                pl.BlockSpec((1, NC_PAD), lambda k: (0, 0)),    # bfc (resident)
            ],
            out_specs=pl.BlockSpec((B, NC_PAD), lambda k: (0, 0)),
            scratch_shapes=[pltpu.VMEM((B, FEAT), jnp.float32)],
        ),
        compiler_params=pltpu.CompilerParams(
            dimension_semantics=("arbitrary",),     # K is a reduction axis
            vmem_limit_bytes=32 * 1024 * 1024,      # explicit; safe on v5e..v7x
        ),
    )(x_bf, wsum, bsum, wfc_p, bfc_p)

    return out_pad[:, :NUM_CLASSES]


def init_params(key, in_features):
    # PyTorch-nn.Linear-style uniform(-1/sqrt(fan_in), 1/sqrt(fan_in)) init.
    k = jax.random.split(key, 6)

    def lin(kw, kb, fan_in, fan_out):
        bound = 1.0 / jnp.sqrt(jnp.float32(fan_in))
        w = jax.random.uniform(kw, (fan_in, fan_out), jnp.float32, -bound, bound)
        b = jax.random.uniform(kb, (1, fan_out), jnp.float32, -bound, bound)
        return w, b

    w1, b1 = lin(k[0], k[1], in_features, FEAT)
    w2, b2 = lin(k[2], k[3], in_features, FEAT)
    wfc, bfc = lin(k[4], k[5], FEAT, NUM_CLASSES)
    return (w1, b1, w2, b2, wfc, bfc)


def reference_forward(x_nchw, params):
    # Pure-JAX, full-f32, PyTorch-faithful forward (no fold, no bf16).
    B = x_nchw.shape[0]
    x = x_nchw.reshape(B, -1).astype(jnp.float32)
    w1, b1, w2, b2, wfc, bfc = params
    x1 = x @ w1 + b1
    x2 = x @ w2 + b2
    return (x1 + x2) @ wfc + bfc


def reference_forward_kernel_precision(x_nchw, params):
    # Same math with the kernel's folded bf16 weight stream / f32 accumulation.
    B = x_nchw.shape[0]
    x = x_nchw.reshape(B, -1).astype(jnp.bfloat16)
    w1, b1, w2, b2, wfc, bfc = params
    wsum = (w1 + w2).astype(jnp.bfloat16)
    feats = jnp.dot(x, wsum, preferred_element_type=jnp.float32) + (b1 + b2)
    return jnp.dot(feats, wfc, preferred_element_type=jnp.float32) + bfc


if __name__ == "__main__":
    key = jax.random.PRNGKey(0)
    kx, kp = jax.random.split(key)

    B, C, H, W = 2, 4, 16, 16
    x = jax.random.normal(kx, (B, C, H, W), jnp.float32)
    params = init_params(kp, C * H * W)

    out = ensemble_forward(x, params)
    out = jax.block_until_ready(out)
    assert out.shape == (B, NUM_CLASSES)

    # Tight check vs a reference that matches the kernel's precision choices.
    ref_kp = reference_forward_kernel_precision(x, params)
    assert jnp.allclose(out, ref_kp, atol=1e-2, rtol=1e-2)

    # Looser check vs the full-f32 PyTorch-faithful reference (bf16 weight
    # streaming + weight folding change accumulation precision/order).
    ref_f32 = reference_forward(x, params)
    assert jnp.allclose(out, ref_f32, atol=5e-2, rtol=5e-2)

    print("KERNEL_OK")
</pallas_src>

<mosaic_0001>
module attributes {stable_mosaic.version = 11 : i64} {
  func.func @ensemble_kernel(%arg0: i32, %arg1: memref<2x512xbf16, #tpu.memory_space<vmem>>, %arg2: memref<512x512xbf16, #tpu.memory_space<vmem>>, %arg3: memref<1x512xf32, #tpu.memory_space<vmem>>, %arg4: memref<512x128xf32, #tpu.memory_space<vmem>>, %arg5: memref<1x128xf32, #tpu.memory_space<vmem>>, %arg6: memref<2x128xf32, #tpu.memory_space<vmem>>, %arg7: memref<2x512xf32, #tpu.memory_space<vmem>>) attributes {dimension_semantics = [#tpu.dimension_semantics<arbitrary>], iteration_bounds = array<i64: 2>, scalar_prefetch = 0 : i64, scratch_operands = 1 : i64, tpu.core_type = #tpu.core_type<tc>, window_params = [{transform_indices = @transform_0, window_bounds = array<i64: 2, 512>}, {transform_indices = @transform_1, window_bounds = array<i64: 512, 512>}, {pipeline_mode = #tpu.pipeline_mode<synchronous>, transform_indices = @transform_2, window_bounds = array<i64: 1, 512>}, {pipeline_mode = #tpu.pipeline_mode<synchronous>, transform_indices = @transform_3, window_bounds = array<i64: 512, 128>}, {pipeline_mode = #tpu.pipeline_mode<synchronous>, transform_indices = @transform_4, window_bounds = array<i64: 1, 128>}, {pipeline_mode = #tpu.pipeline_mode<synchronous>, transform_indices = @transform_5, window_bounds = array<i64: 2, 128>}]} {
    %c0_i32 = arith.constant 0 : i32
    %0 = arith.cmpi eq, %arg0, %c0_i32 : i32
    %1 = arith.extui %0 : i1 to i32
    %c0_i32_0 = arith.constant 0 : i32
    %2 = arith.cmpi ne, %1, %c0_i32_0 : i32
    scf.if %2 {
      %cst_9 = arith.constant 0.000000e+00 : f32
      %12 = vector.broadcast %cst_9 : f32 to vector<2x512xf32>
      %c0_10 = arith.constant 0 : index
      %c0_11 = arith.constant 0 : index
      %13 = vector.load %arg7[%c0_10, %c0_11] : memref<2x512xf32, #tpu.memory_space<vmem>>, vector<2x512xf32>
      tpu.vector_store %arg7[%c0_10, %c0_11], %12 {strides = array<i32>} : memref<2x512xf32, #tpu.memory_space<vmem>>, vector<2x512xf32>,
    } else {
    }
    %c0 = arith.constant 0 : index
    %c0_1 = arith.constant 0 : index
    %3 = vector.load %arg7[%c0, %c0_1] : memref<2x512xf32, #tpu.memory_space<vmem>>, vector<2x512xf32>
    %c0_2 = arith.constant 0 : index
    %c0_3 = arith.constant 0 : index
    %4 = vector.load %arg1[%c0_2, %c0_3] : memref<2x512xbf16, #tpu.memory_space<vmem>>, vector<2x512xbf16>
    %c0_4 = arith.constant 0 : index
    %c0_5 = arith.constant 0 : index
    %5 = vector.load %arg2[%c0_4, %c0_5] : memref<512x512xbf16, #tpu.memory_space<vmem>>, vector<512x512xbf16>
    %cst = arith.constant dense<0.000000e+00> : vector<2x512xf32>
    %6 = tpu.matmul %4, %5, %cst {dimension_numbers = #tpu.dot_dimension_numbers<[1], [0], [0], [1], [0, 0, 1, 1], [], []>} : vector<2x512xbf16>, vector<512x512xbf16>, vector<2x512xf32> -> vector<2x512xf32>
    %7 = arith.addf %3, %6 : vector<2x512xf32>
    %c0_6 = arith.constant 0 : index
    %c0_7 = arith.constant 0 : index
    %8 = vector.load %arg7[%c0_6, %c0_7] : memref<2x512xf32, #tpu.memory_space<vmem>>, vector<2x512xf32>
    tpu.vector_store %arg7[%c0_6, %c0_7], %7 {strides = array<i32>} : memref<2x512xf32, #tpu.memory_space<vmem>>, vector<2x512xf32>,
    %c1_i32 = arith.constant 1 : i32
    %9 = arith.cmpi eq, %arg0, %c1_i32 : i32
    %10 = arith.extui %9 : i1 to i32
    %c0_i32_8 = arith.constant 0 : i32
    %11 = arith.cmpi ne, %10, %c0_i32_8 : i32
    scf.if %11 {
      %c0_9 = arith.constant 0 : index
      %c0_10 = arith.constant 0 : index
      %12 = vector.load %arg7[%c0_9, %c0_10] : memref<2x512xf32, #tpu.memory_space<vmem>>, vector<2x512xf32>
      %c0_11 = arith.constant 0 : index
      %c0_12 = arith.constant 0 : index
      %13 = vector.load %arg3[%c0_11, %c0_12] : memref<1x512xf32, #tpu.memory_space<vmem>>, vector<1x512xf32>
      %14 = vector.broadcast %13 : vector<1x512xf32> to vector<2x512xf32>
      %15 = arith.addf %12, %14 : vector<2x512xf32>
      %c0_13 = arith.constant 0 : index
      %c0_14 = arith.constant 0 : index
      %16 = vector.load %arg4[%c0_13, %c0_14] : memref<512x128xf32, #tpu.memory_space<vmem>>, vector<512x128xf32>
      %cst_15 = arith.constant dense<0.000000e+00> : vector<2x128xf32>
      %17 = tpu.matmul %15, %16, %cst_15 {dimension_numbers = #tpu.dot_dimension_numbers<[1], [0], [0], [1], [0, 0, 1, 1], [], []>} : vector<2x512xf32>, vector<512x128xf32>, vector<2x128xf32> -> vector<2x128xf32>
      %c0_16 = arith.constant 0 : index
      %c0_17 = arith.constant 0 : index
      %18 = vector.load %arg5[%c0_16, %c0_17] : memref<1x128xf32, #tpu.memory_space<vmem>>, vector<1x128xf32>
      %19 = vector.broadcast %18 : vector<1x128xf32> to vector<2x128xf32>
      %20 = arith.addf %17, %19 : vector<2x128xf32>
      %c0_18 = arith.constant 0 : index
      %c0_19 = arith.constant 0 : index
      %21 = vector.load %arg6[%c0_18, %c0_19] : memref<2x128xf32, #tpu.memory_space<vmem>>, vector<2x128xf32>
      tpu.vector_store %arg6[%c0_18, %c0_19], %20 {strides = array<i32>} : memref<2x128xf32, #tpu.memory_space<vmem>>, vector<2x128xf32>,
    } else {
    }
    return
  }
  func.func @transform_0(%arg0: i32) -> (i32, i32) {
    %c0_i32 = arith.constant 0 : i32
    %c0_i32_0 = arith.constant 0 : i32
    return %c0_i32, %arg0 : i32, i32
  }
  func.func @transform_1(%arg0: i32) -> (i32, i32) {
    %c0_i32 = arith.constant 0 : i32
    %c0_i32_0 = arith.constant 0 : i32
    return %arg0, %c0_i32 : i32, i32
  }
  func.func @transform_2(%arg0: i32) -> (i32, i32) {
    %c0_i32 = arith.constant 0 : i32
    %c0_i32_0 = arith.constant 0 : i32
    %c0_i32_1 = arith.constant 0 : i32
    return %c0_i32, %c0_i32_0 : i32, i32
  }
  func.func @transform_3(%arg0: i32) -> (i32, i32) {
    %c0_i32 = arith.constant 0 : i32
    %c0_i32_0 = arith.constant 0 : i32
    %c0_i32_1 = arith.constant 0 : i32
    return %c0_i32, %c0_i32_0 : i32, i32
  }
  func.func @transform_4(%arg0: i32) -> (i32, i32) {
    %c0_i32 = arith.constant 0 : i32
    %c0_i32_0 = arith.constant 0 : i32
    %c0_i32_1 = arith.constant 0 : i32
    return %c0_i32, %c0_i32_0 : i32, i32
  }
  func.func @transform_5(%arg0: i32) -> (i32, i32) {
    %c0_i32 = arith.constant 0 : i32
    %c0_i32_0 = arith.constant 0 : i32
    %c0_i32_1 = arith.constant 0 : i32
    return %c0_i32, %c0_i32_0 : i32, i32
  }
}

</mosaic_0001>

<llo_original>
// kernel: tpu_custom_call.1
$region0: #{tpu_custom_call.1}
  #allocation0 [shape = 'u32[]', space=smem, size = 0x4, offset = 0x4, fixed_abs, tag = 'smem constant byte address 0x4 - core index']
  #allocation1 [shape = 'u32[144,128]{1,0:T(1,128)}', space=vmem, size = 0x12000, scoped, tag = 'internal scratch']
  #allocation2 [shape = 'f32[2,512]{1,0:T(2,128)}', space=vmem, size = 0x1000, scoped, tag = 'scratch operand']
  %s0 = inlined_call_operand.hbm [shape: bf16[2,1024], index: 0, kind: input, shape index: {}]
  %s1 = inlined_call_operand.hbm [shape: bf16[1024,512], index: 1, kind: input, shape index: {}]
  %s2 = inlined_call_operand.vmem [shape: f32[1,512], index: 2, kind: input, shape index: {}]
  %s3 = inlined_call_operand.hbm [shape: f32[512,128], index: 3, kind: input, shape index: {}]
  %s4 = inlined_call_operand.vmem [shape: f32[1,128], index: 4, kind: input, shape index: {}]
  %s5 = inlined_call_operand.hbm [shape: f32[2,128], index: 5, kind: output, shape index: {}]
  %s6 = sld [smem:[#allocation0]]
  $region73: #{tpu_custom_call.1} parent=0
    _
  %s8 = ssub.s32 1, %s6
  %s9 = scalar_select 0, %s8, %s6
  $region1: #{tpu_custom_call.1} parent=0
    #allocation3 [shape = 'u8[4096]{0}', space=vmem, size = 0x1000, scoped, tag = 'input window, operand 0']
    #allocation4 [shape = 's32[2]{0}', space=sflag, size = 0x8, scoped, tag = 'scoped memory for tpu_custom_call.1']
    #allocation5 [shape = 's32[2]{0}', space=sflag, size = 0x8, scoped, tag = 'scoped memory for tpu_custom_call.1']
    #allocation6 [shape = 'u8[1048576]{0}', space=vmem, size = 0x100000, scoped, tag = 'input window, operand 1']
    #allocation7 [shape = 's32[2]{0}', space=sflag, size = 0x8, scoped, tag = 'scoped memory for tpu_custom_call.1']
    #allocation8 [shape = 'u8[262144]{0}', space=vmem, size = 0x40000, scoped, tag = 'input window, operand 3, single buffered']
    #allocation9 [shape = 'u8[1024]{0}', space=vmem, size = 0x400, scoped, tag = 'output window, operand 0, single buffered']
    %10 = vsyncpa [#allocation4], 0
    %s11 = scalar_lea.sflag [#allocation4], 1
    %12 = vsyncpa %s11, 0
    %13 = vsyncpa [#allocation7], 0
    %s14 = scalar_lea.sflag [#allocation7], 1
    %15 = vsyncpa %s14, 0
    %16 = vsyncpa [#allocation5], 0
    loop: start=0, step=1, limit=4
    $region2: #{tpu_custom_call.1} parent=1 // loop_pre_header
      _
    $region3: #{tpu_custom_call.1} parent=1 // loop_header
      %s18 = sphi 0, %s22
      %p19 = scmp.ge.s32.totalorder %s18, 4
      %s28 = sphi 0, %s30
      %s31 = sphi 0, %s28
      %s32 = sphi 0, %s31
      %s48 = sphi 0, %s32
      %s54 = sphi 0, %s56
      %s57 = sphi 0, %s54
      %s58 = sphi 0, %s57
      %s74 = sphi 0, %s58
      %s78 = sphi 0, %s78
      %s80 = sphi 0, %s78
      %s81 = sphi 0, %s80
      %s95 = sphi 0, %s81
      %s99 = sphi 0, %s99
      %s101 = sphi 0, %s99
      %s102 = sphi 0, %s101
      %s116 = sphi 0, %s102
      %s120 = sphi 0, %s120
      %s122 = sphi 0, %s120
      %s123 = sphi 0, %s122
      %s137 = sphi 0, %s123
      %s141 = sphi 0, %s141
      %s143 = sphi 0, %s141
      %s144 = sphi 0, %s143
      %s158 = sphi 0, %s144
    $region4: #{tpu_custom_call.1} parent=1 // loop_header_branch
      %21 = sbr.rel (%p19) target = $region8
    $region5: #{tpu_custom_call.1} parent=1 // loop_body
      %s23 = ssub.s32 %s18, 1
      %s24 = ssub.s32 %s18, 2
      %s25 = sadd.s32 %s18, 1
      %s26 = ssub.s32 %s18, %s25
      %p27 = scmp.eq.s32.totalorder %s26, 0
      %s29 = sadd.s32 %s28, 1
      %s30 = scalar_select %p27, %s28, %s29
      %p33 = pneg %p27
      %p34 = scmp.eq.s32.totalorder %s18, 1
      %p35 = por %p33, %p34
      %p36 = scmp.ne.s32.totalorder %s28, %s31
      %p37 = scmp.eq.s32.totalorder %s18, 0
      %p38 = por %p36, %p37
      %p39 = scmp.ne.s32.totalorder %s28, %s31
      %p40 = scmp.eq.s32.totalorder %s23, 1
      %p41 = por %p39, %p40
      %p42 = scmp.ne.s32.totalorder %s31, %s32
      %p43 = scmp.eq.s32.totalorder %s23, 0
      %p44 = por %p42, %p43
      %p45 = scmp.ne.s32.totalorder %s31, %s32
      %p46 = scmp.eq.s32.totalorder %s24, 1
      %p47 = por %p45, %p46
      %p49 = scmp.ne.s32.totalorder %s32, %s48
      %p50 = scmp.eq.s32.totalorder %s24, 0
      %p51 = por %p49, %p50
      %s52 = ssub.s32 %s18, %s25
      %p53 = scmp.eq.s32.totalorder %s52, 0
      %s55 = sadd.s32 %s54, 1
      %s56 = scalar_select %p53, %s54, %s55
      %p59 = pneg %p53
      %p60 = scmp.eq.s32.totalorder %s18, 1
      %p61 = por %p59, %p60
      %p62 = scmp.ne.s32.totalorder %s54, %s57
      %p63 = scmp.eq.s32.totalorder %s18, 0
      %p64 = por %p62, %p63
      %p65 = scmp.ne.s32.totalorder %s54, %s57
      %p66 = scmp.eq.s32.totalorder %s23, 1
      %p67 = por %p65, %p66
      %p68 = scmp.ne.s32.totalorder %s57, %s58
      %p69 = scmp.eq.s32.totalorder %s23, 0
      %p70 = por %p68, %p69
      %p71 = scmp.ne.s32.totalorder %s57, %s58
      %p72 = scmp.eq.s32.totalorder %s24, 1
      %p73 = por %p71, %p72
      %p75 = scmp.ne.s32.totalorder %s58, %s74
      %p76 = scmp.eq.s32.totalorder %s24, 0
      %p77 = por %p75, %p76
      %s79 = sadd.s32 %s78, 1
      %p82 = scmp.eq.s32.totalorder %s18, 1
      %p83 = scmp.ne.s32.totalorder %s78, %s80
      %p84 = scmp.eq.s32.totalorder %s18, 0
      %p85 = por %p83, %p84
      %p86 = scmp.ne.s32.totalorder %s78, %s80
      %p87 = scmp.eq.s32.totalorder %s23, 1
      %p88 = por %p86, %p87
      %p89 = scmp.ne.s32.totalorder %s80, %s81
      %p90 = scmp.eq.s32.totalorder %s23, 0
      %p91 = por %p89, %p90
      %p92 = scmp.ne.s32.totalorder %s80, %s81
      %p93 = scmp.eq.s32.totalorder %s24, 1
      %p94 = por %p92, %p93
      %p96 = scmp.ne.s32.totalorder %s81, %s95
      %p97 = scmp.eq.s32.totalorder %s24, 0
      %p98 = por %p96, %p97
      %s100 = sadd.s32 %s99, 1
      %p103 = scmp.eq.s32.totalorder %s18, 1
      %p104 = scmp.ne.s32.totalorder %s99, %s101
      %p105 = scmp.eq.s32.totalorder %s18, 0
      %p106 = por %p104, %p105
      %p107 = scmp.ne.s32.totalorder %s99, %s101
      %p108 = scmp.eq.s32.totalorder %s23, 1
      %p109 = por %p107, %p108
      %p110 = scmp.ne.s32.totalorder %s101, %s102
      %p111 = scmp.eq.s32.totalorder %s23, 0
      %p112 = por %p110, %p111
      %p113 = scmp.ne.s32.totalorder %s101, %s102
      %p114 = scmp.eq.s32.totalorder %s24, 1
      %p115 = por %p113, %p114
      %p117 = scmp.ne.s32.totalorder %s102, %s116
      %p118 = scmp.eq.s32.totalorder %s24, 0
      %p119 = por %p117, %p118
      %s121 = sadd.s32 %s120, 1
      %p124 = scmp.eq.s32.totalorder %s18, 1
      %p125 = scmp.ne.s32.totalorder %s120, %s122
      %p126 = scmp.eq.s32.totalorder %s18, 0
      %p127 = por %p125, %p126
      %p128 = scmp.ne.s32.totalorder %s120, %s122
      %p129 = scmp.eq.s32.totalorder %s23, 1
      %p130 = por %p128, %p129
      %p131 = scmp.ne.s32.totalorder %s122, %s123
      %p132 = scmp.eq.s32.totalorder %s23, 0
      %p133 = por %p131, %p132
      %p134 = scmp.ne.s32.totalorder %s122, %s123
      %p135 = scmp.eq.s32.totalorder %s24, 1
      %p136 = por %p134, %p135
      %p138 = scmp.ne.s32.totalorder %s123, %s137
      %p139 = scmp.eq.s32.totalorder %s24, 0
      %p140 = por %p138, %p139
      %s142 = sadd.s32 %s141, 1
      %p145 = scmp.eq.s32.totalorder %s18, 1
      %p146 = scmp.ne.s32.totalorder %s141, %s143
      %p147 = scmp.eq.s32.totalorder %s18, 0
      %p148 = por %p146, %p147
      %p149 = scmp.ne.s32.totalorder %s141, %s143
      %p150 = scmp.eq.s32.totalorder %s23, 1
      %p151 = por %p149, %p150
      %p152 = scmp.ne.s32.totalorder %s143, %s144
      %p153 = scmp.eq.s32.totalorder %s23, 0
      %p154 = por %p152, %p153
      %p155 = scmp.ne.s32.totalorder %s143, %s144
      %p156 = scmp.eq.s32.totalorder %s24, 1
      %p157 = por %p155, %p156
      %p159 = scmp.ne.s32.totalorder %s144, %s158
      %p160 = scmp.eq.s32.totalorder %s24, 0
      %p161 = por %p159, %p160
      %p162 = scmp.le.s32.totalorder 1, %s18
      %p163 = scmp.lt.s32.totalorder %s18, 3
      %p164 = pnand %p162, %p163
      %p165 = pneg %p164
      // Predicated region
      $region9: #{tpu_custom_call.1} parent=5 // pred_check
        _
      $region10: #{tpu_custom_call.1} parent=5 // pred_check_branch
        %167 = sbr.rel (%p164) target = $region12
      $region11: #{tpu_custom_call.1} parent=5 // pred_region
        %s168 = ssub.s32 %s18, 1
        // Predicated region
        $region13: #{tpu_custom_call.1} parent=11 // pred_check
          %p169 = pneg %p91
        $region14: #{tpu_custom_call.1} parent=11 // pred_check_branch
          %171 = sbr.rel (%p169) target = $region16
        $region15: #{tpu_custom_call.1} parent=11 // pred_region
          _
        $region16: #{tpu_custom_call.1} parent=11 // pred_fallthru
          _
        // Predicated region
        $region17: #{tpu_custom_call.1} parent=11 // pred_check
          %p172 = pneg %p112
        $region18: #{tpu_custom_call.1} parent=11 // pred_check_branch
          %174 = sbr.rel (%p172) target = $region20
        $region19: #{tpu_custom_call.1} parent=11 // pred_region
          %s176 = ssub.s32 8192, 8192
          %177 = vsyncadd [#allocation7], %s176
          %s178 = sshll.u32 [#allocation8], 4
          %s179 = int_to_ptr.vmem [resolvable:$true] %s178
          %184 = dma.hbm_to_vmem [thread:$0]  %s3, 8192, %s179, [#allocation7], 128, 128, 8
        $region20: #{tpu_custom_call.1} parent=11 // pred_fallthru
          _
        // Predicated region
        $region21: #{tpu_custom_call.1} parent=11 // pred_check
          %p185 = pneg %p133
        $region22: #{tpu_custom_call.1} parent=11 // pred_check_branch
          %187 = sbr.rel (%p185) target = $region24
        $region23: #{tpu_custom_call.1} parent=11 // pred_region
          _
        $region24: #{tpu_custom_call.1} parent=11 // pred_fallthru
          _
      $region12: #{tpu_custom_call.1} parent=5 // pred_fallthru
        _
      %p188 = scmp.lt.s32.totalorder %s18, 2
      // Predicated region
      $region25: #{tpu_custom_call.1} parent=5 // pred_check
        %p189 = pneg %p188
      $region26: #{tpu_custom_call.1} parent=5 // pred_check_branch
        %191 = sbr.rel (%p189) target = $region28
      $region27: #{tpu_custom_call.1} parent=5 // pred_region
        // Predicated region
        $region29: #{tpu_custom_call.1} parent=27 // pred_check
          %p192 = pneg %p38
        $region30: #{tpu_custom_call.1} parent=27 // pred_check_branch
          %194 = sbr.rel (%p192) target = $region32
        $region31: #{tpu_custom_call.1} parent=27 // pred_region
          %s195 = sand.u32 %s28, 1
          %s196 = scalar_lea.sflag [#allocation4], %s195
          %s197 = sand.u32 %s28, 1
          %s198 = smul.addr %s197, 4
          %s199 = scalar_lea.vmem [#allocation3], %s198
          %s200 = smul.u32 4, %s18
          %s202 = ssub.s32 64, 64
          %203 = vsyncadd %s196, %s202
          %s204 = smul.addr %s200, 16
          %s205 = scalar_lea.hbm %s0, %s204
          %s207 = sshll.u32 %s199, 4
          %s208 = int_to_ptr.vmem [resolvable:$true] %s207
          %210 = dma.hbm_to_vmem [thread:$0]  %s205, 64, %s208, %s196
        $region32: #{tpu_custom_call.1} parent=27 // pred_fallthru
          _
        // Predicated region
        $region33: #{tpu_custom_call.1} parent=27 // pred_check
          %p211 = pneg %p64
        $region34: #{tpu_custom_call.1} parent=27 // pred_check_branch
          %213 = sbr.rel (%p211) target = $region36
        $region35: #{tpu_custom_call.1} parent=27 // pred_region
          %s214 = sand.u32 %s18, 1
          %s215 = scalar_lea.sflag [#allocation7], %s214
          %s216 = sand.u32 %s54, 1
          %s217 = smul.addr %s216, 1024
          %s218 = scalar_lea.vmem [#allocation6], %s217
          %s219 = smul.u32 64, %s18
          %s221 = ssub.s32 16384, 16384
          %222 = vsyncadd %s215, %s221
          %s223 = smul.addr %s219, 4
          %s224 = smul.addr %s223, 64
          %s225 = scalar_lea.hbm %s1, %s224
          %s226 = sshll.u32 %s218, 4
          %s227 = int_to_ptr.vmem [resolvable:$true] %s226
          %232 = dma.hbm_to_vmem [thread:$0]  %s225, 16384, %s227, %s215, 256, 256, 16
        $region36: #{tpu_custom_call.1} parent=27 // pred_fallthru
          _
      $region28: #{tpu_custom_call.1} parent=5 // pred_fallthru
        _
      %p233 = scmp.le.s32.totalorder 1, %s18
      %p234 = scmp.lt.s32.totalorder %s18, 3
      %p235 = pnand %p233, %p234
      %p236 = pneg %p235
      // Predicated region
      $region37: #{tpu_custom_call.1} parent=5 // pred_check
        _
      $region38: #{tpu_custom_call.1} parent=5 // pred_check_branch
        %238 = sbr.rel (%p235) target = $region40
      $region39: #{tpu_custom_call.1} parent=5 // pred_region
        %s239 = ssub.s32 %s18, 1
        %s240 = sand.u32 %s31, 1
        %s241 = scalar_lea.sflag [#allocation4], %s240
        %s242 = sand.u32 %s31, 1
        %s243 = smul.addr %s242, 4
        %s244 = scalar_lea.vmem [#allocation3], %s243
        // Predicated region
        $region41: #{tpu_custom_call.1} parent=39 // pred_check
          %p245 = pneg %p44
        $region42: #{tpu_custom_call.1} parent=39 // pred_check_branch
          %247 = sbr.rel (%p245) target = $region44
        $region43: #{tpu_custom_call.1} parent=39 // pred_region
          %248 = dma.done %s241, 64
        $region44: #{tpu_custom_call.1} parent=39 // pred_fallthru
          _
        %s249 = sand.u32 %s23, 1
        %s250 = scalar_lea.sflag [#allocation7], %s249
        %s251 = sand.u32 %s57, 1
        %s252 = smul.addr %s251, 1024
        %s253 = scalar_lea.vmem [#allocation6], %s252
        // Predicated region
        $region45: #{tpu_custom_call.1} parent=39 // pred_check
          %p254 = pneg %p70
        $region46: #{tpu_custom_call.1} parent=39 // pred_check_branch
          %256 = sbr.rel (%p254) target = $region48
        $region47: #{tpu_custom_call.1} parent=39 // pred_region
          %257 = dma.done %s250, 16384
        $region48: #{tpu_custom_call.1} parent=39 // pred_fallthru
          _
        // Predicated region
        $region49: #{tpu_custom_call.1} parent=39 // pred_check
          %p258 = pneg %p112
        $region50: #{tpu_custom_call.1} parent=39 // pred_check_branch
          %260 = sbr.rel (%p258) target = $region52
        $region51: #{tpu_custom_call.1} parent=39 // pred_region
          %261 = dma.done [#allocation7], 8192
        $region52: #{tpu_custom_call.1} parent=39 // pred_fallthru
          _
        %s262 = sand.u32 %s31, 1
        %s263 = scalar_lea.sflag [#allocation4], %s262
        %s264 = sand.u32 %s31, 1
        %s265 = smul.addr %s264, 4
        %s266 = scalar_lea.vmem [#allocation3], %s265
        %p267 = pneg %p44
        %p268 = pneg %p41
        %s269 = sand.u32 %s23, 1
        %s270 = scalar_lea.sflag [#allocation7], %s269
        %s271 = sand.u32 %s57, 1
        %s272 = smul.addr %s271, 1024
        %s273 = scalar_lea.vmem [#allocation6], %s272
        %p274 = pneg %p70
        %p275 = pneg %p67
        %p276 = pneg %p91
        %p277 = pneg %p88
        %p278 = pneg %p112
        %p279 = pneg %p109
        %p280 = pneg %p133
        %p281 = pneg %p130
        %p282 = pneg %p154
        %p283 = pneg %p151
        %s284 = smul.u32 4, %s23
        %s285 = smul.u32 64, %s23
        %p286 = scmp.eq.s32.totalorder %s23, 0
        // Predicated region
        $region53: #{tpu_custom_call.1} parent=39 // pred_check
          %p287 = pneg %p286
        $region54: #{tpu_custom_call.1} parent=39 // pred_check_branch
          %289 = sbr.rel (%p287) target = $region56
        $region55: #{tpu_custom_call.1} parent=39 // pred_region
          %290 = vst [vmem:[#allocation2] sm:$0xff] 0.0
        $region56: #{tpu_custom_call.1} parent=39 // pred_fallthru
          _
        %v291 = vld [vmem:[#allocation2] sm:$0xff]
        %v292 = vld [vmem:[%s244] sm:$0xf]
        %v293 = vld [vmem:[%s253] sm:$0xff]
        %v294 = vld [vmem:[%s253 + $0x8] sm:$0xff]
        %v295 = vld [vmem:[%s253 + $0x10] sm:$0xff]
        %v296 = vld [vmem:[%s253 + $0x18] sm:$0xff]
        %v297 = vld [vmem:[%s253 + $0x20] sm:$0xff]
        %v298 = vld [vmem:[%s253 + $0x28] sm:$0xff]
        %v299 = vld [vmem:[%s253 + $0x30] sm:$0xff]
        %v300 = vld [vmem:[%s253 + $0x38] sm:$0xff]
        %v301 = vld [vmem:[%s253 + $0x40] sm:$0xff]
        %v302 = vld [vmem:[%s253 + $0x48] sm:$0xff]
        %v303 = vld [vmem:[%s253 + $0x50] sm:$0xff]
        %v304 = vld [vmem:[%s253 + $0x58] sm:$0xff]
        %v305 = vld [vmem:[%s253 + $0x60] sm:$0xff]
        %v306 = vld [vmem:[%s253 + $0x68] sm:$0xff]
        %v307 = vld [vmem:[%s253 + $0x70] sm:$0xff]
        %v308 = vld [vmem:[%s253 + $0x78] sm:$0xff]
        %v309 = vld [vmem:[%s253 + $0x80] sm:$0xff]
        %v310 = vld [vmem:[%s253 + $0x88] sm:$0xff]
        %v311 = vld [vmem:[%s253 + $0x90] sm:$0xff]
        %v312 = vld [vmem:[%s253 + $0x98] sm:$0xff]
        %v313 = vld [vmem:[%s253 + $0xa0] sm:$0xff]
        %v314 = vld [vmem:[%s253 + $0xa8] sm:$0xff]
        %v315 = vld [vmem:[%s253 + $0xb0] sm:$0xff]
        %v316 = vld [vmem:[%s253 + $0xb8] sm:$0xff]
        %v317 = vld [vmem:[%s253 + $0xc0] sm:$0xff]
        %v318 = vld [vmem:[%s253 + $0xc8] sm:$0xff]
        %v319 = vld [vmem:[%s253 + $0xd0] sm:$0xff]
        %v320 = vld [vmem:[%s253 + $0xd8] sm:$0xff]
        %v321 = vld [vmem:[%s253 + $0xe0] sm:$0xff]
        %v322 = vld [vmem:[%s253 + $0xe8] sm:$0xff]
        %v323 = vld [vmem:[%s253 + $0xf0] sm:$0xff]
        %v324 = vld [vmem:[%s253 + $0xf8] sm:$0xff]
        %v325 = vld [vmem:[%s253 + $0x100] sm:$0xff]
        %v326 = vld [vmem:[%s253 + $0x108] sm:$0xff]
        %v327 = vld [vmem:[%s253 + $0x110] sm:$0xff]
        %v328 = vld [vmem:[%s253 + $0x118] sm:$0xff]
        %v329 = vld [vmem:[%s253 + $0x120] sm:$0xff]
        %v330 = vld [vmem:[%s253 + $0x128] sm:$0xff]
        %v331 = vld [vmem:[%s253 + $0x130] sm:$0xff]
        %v332 = vld [vmem:[%s253 + $0x138] sm:$0xff]
        %v333 = vld [vmem:[%s253 + $0x140] sm:$0xff]
        %v334 = vld [vmem:[%s253 + $0x148] sm:$0xff]
        %v335 = vld [vmem:[%s253 + $0x150] sm:$0xff]
        %v336 = vld [vmem:[%s253 + $0x158] sm:$0xff]
        %v337 = vld [vmem:[%s253 + $0x160] sm:$0xff]
        %v338 = vld [vmem:[%s253 + $0x168] sm:$0xff]
        %v339 = vld [vmem:[%s253 + $0x170] sm:$0xff]
        %v340 = vld [vmem:[%s253 + $0x178] sm:$0xff]
        %v341 = vld [vmem:[%s253 + $0x180] sm:$0xff]
        %v342 = vld [vmem:[%s253 + $0x188] sm:$0xff]
        %v343 = vld [vmem:[%s253 + $0x190] sm:$0xff]
        %v344 = vld [vmem:[%s253 + $0x198] sm:$0xff]
        %v345 = vld [vmem:[%s253 + $0x1a0] sm:$0xff]
        %v346 = vld [vmem:[%s253 + $0x1a8] sm:$0xff]
        %v347 = vld [vmem:[%s253 + $0x1b0] sm:$0xff]
        %v348 = vld [vmem:[%s253 + $0x1b8] sm:$0xff]
        %v349 = vld [vmem:[%s253 + $0x1c0] sm:$0xff]
        %v350 = vld [vmem:[%s253 + $0x1c8] sm:$0xff]
        %v351 = vld [vmem:[%s253 + $0x1d0] sm:$0xff]
        %v352 = vld [vmem:[%s253 + $0x1d8] sm:$0xff]
        %v353 = vld [vmem:[%s253 + $0x1e0] sm:$0xff]
        %v354 = vld [vmem:[%s253 + $0x1e8] sm:$0xff]
        %v355 = vld [vmem:[%s253 + $0x1f0] sm:$0xff]
        %v356 = vld [vmem:[%s253 + $0x1f8] sm:$0xff]
        %v357 = vld [vmem:[%s253 + $0x200] sm:$0xff]
        %v358 = vld [vmem:[%s253 + $0x208] sm:$0xff]
        %v359 = vld [vmem:[%s253 + $0x210] sm:$0xff]
        %v360 = vld [vmem:[%s253 + $0x218] sm:$0xff]
        %v361 = vld [vmem:[%s253 + $0x220] sm:$0xff]
        %v362 = vld [vmem:[%s253 + $0x228] sm:$0xff]
        %v363 = vld [vmem:[%s253 + $0x230] sm:$0xff]
        %v364 = vld [vmem:[%s253 + $0x238] sm:$0xff]
        %v365 = vld [vmem:[%s253 + $0x240] sm:$0xff]
        %v366 = vld [vmem:[%s253 + $0x248] sm:$0xff]
        %v367 = vld [vmem:[%s253 + $0x250] sm:$0xff]
        %v368 = vld [vmem:[%s253 + $0x258] sm:$0xff]
        %v369 = vld [vmem:[%s253 + $0x260] sm:$0xff]
        %v370 = vld [vmem:[%s253 + $0x268] sm:$0xff]
        %v371 = vld [vmem:[%s253 + $0x270] sm:$0xff]
        %v372 = vld [vmem:[%s253 + $0x278] sm:$0xff]
        %v373 = vld [vmem:[%s253 + $0x280] sm:$0xff]
        %v374 = vld [vmem:[%s253 + $0x288] sm:$0xff]
        %v375 = vld [vmem:[%s253 + $0x290] sm:$0xff]
        %v376 = vld [vmem:[%s253 + $0x298] sm:$0xff]
        %v377 = vld [vmem:[%s253 + $0x2a0] sm:$0xff]
        %v378 = vld [vmem:[%s253 + $0x2a8] sm:$0xff]
        %v379 = vld [vmem:[%s253 + $0x2b0] sm:$0xff]
        %v380 = vld [vmem:[%s253 + $0x2b8] sm:$0xff]
        %v381 = vld [vmem:[%s253 + $0x2c0] sm:$0xff]
        %v382 = vld [vmem:[%s253 + $0x2c8] sm:$0xff]
        %v383 = vld [vmem:[%s253 + $0x2d0] sm:$0xff]
        %v384 = vld [vmem:[%s253 + $0x2d8] sm:$0xff]
        %v385 = vld [vmem:[%s253 + $0x2e0] sm:$0xff]
        %v386 = vld [vmem:[%s253 + $0x2e8] sm:$0xff]
        %v387 = vld [vmem:[%s253 + $0x2f0] sm:$0xff]
        %v388 = vld [vmem:[%s253 + $0x2f8] sm:$0xff]
        %v389 = vld [vmem:[%s253 + $0x300] sm:$0xff]
        %v390 = vld [vmem:[%s253 + $0x308] sm:$0xff]
        %v391 = vld [vmem:[%s253 + $0x310] sm:$0xff]
        %v392 = vld [vmem:[%s253 + $0x318] sm:$0xff]
        %v393 = vld [vmem:[%s253 + $0x320] sm:$0xff]
        %v394 = vld [vmem:[%s253 + $0x328] sm:$0xff]
        %v395 = vld [vmem:[%s253 + $0x330] sm:$0xff]
        %v396 = vld [vmem:[%s253 + $0x338] sm:$0xff]
        %v397 = vld [vmem:[%s253 + $0x340] sm:$0xff]
        %v398 = vld [vmem:[%s253 + $0x348] sm:$0xff]
        %v399 = vld [vmem:[%s253 + $0x350] sm:$0xff]
        %v400 = vld [vmem:[%s253 + $0x358] sm:$0xff]
        %v401 = vld [vmem:[%s253 + $0x360] sm:$0xff]
        %v402 = vld [vmem:[%s253 + $0x368] sm:$0xff]
        %v403 = vld [vmem:[%s253 + $0x370] sm:$0xff]
        %v404 = vld [vmem:[%s253 + $0x378] sm:$0xff]
        %v405 = vld [vmem:[%s253 + $0x380] sm:$0xff]
        %v406 = vld [vmem:[%s253 + $0x388] sm:$0xff]
        %v407 = vld [vmem:[%s253 + $0x390] sm:$0xff]
        %v408 = vld [vmem:[%s253 + $0x398] sm:$0xff]
        %v409 = vld [vmem:[%s253 + $0x3a0] sm:$0xff]
        %v410 = vld [vmem:[%s253 + $0x3a8] sm:$0xff]
        %v411 = vld [vmem:[%s253 + $0x3b0] sm:$0xff]
        %v412 = vld [vmem:[%s253 + $0x3b8] sm:$0xff]
        %v413 = vld [vmem:[%s253 + $0x3c0] sm:$0xff]
        %v414 = vld [vmem:[%s253 + $0x3c8] sm:$0xff]
        %v415 = vld [vmem:[%s253 + $0x3d0] sm:$0xff]
        %v416 = vld [vmem:[%s253 + $0x3d8] sm:$0xff]
        %v417 = vld [vmem:[%s253 + $0x3e0] sm:$0xff]
        %v418 = vld [vmem:[%s253 + $0x3e8] sm:$0xff]
        %v419 = vld [vmem:[%s253 + $0x3f0] sm:$0xff]
        %v420 = vld [vmem:[%s253 + $0x3f8] sm:$0xff]
        %v423 = vunpack.c.l.s4 1966171168
        %v424 = vunpack.c.0.s8 %v423
        %v425 = vlaneseq
        %v426 = vshrl.u32 %v425, 7
        %v427 = vsub.s32 %v424, %v426
        %v428 = vrot.slane %v292, %v427
        %v429 = vcombine.high %v428, %v428
        %v431 = vunpack.c.l.s4 1966171168
        %v432 = vunpack.c.0.s8 %v431
        %v433 = vlaneseq
        %v434 = vshrl.u32 %v433, 7
        %v435 = vsub.s32 %v432, %v434
        %v436 = vrot.slane %v428, %v435
        %v438 = vunpack.c.l.s4 1966171168
        %v439 = vunpack.c.0.s8 %v438
        %v440 = vlaneseq
        %v441 = vshrl.u32 %v440, 7
        %v442 = vsub.s32 %v439, %v441
        %v443 = vrot.slane %v429, %v442
        %v444 = vcombine.high %v436, %v436
        %v445 = vcombine.high %v443, %v443
        %v578 = vunpack.c.l.b16 %v293
        %v579 = vunpack.c.h.b16 %v293
        %v580 = vunpack.c.l.b16 %v294
        %v581 = vunpack.c.h.b16 %v294
        %v582 = vunpack.c.l.b16 %v295
        %v583 = vunpack.c.h.b16 %v295
        %v584 = vunpack.c.l.b16 %v296
        %v585 = vunpack.c.h.b16 %v296
        %v586 = vunpack.c.l.b16 %v297
        %v587 = vunpack.c.h.b16 %v297
        %v588 = vunpack.c.l.b16 %v298
        %v589 = vunpack.c.h.b16 %v298
        %v590 = vunpack.c.l.b16 %v299
        %v591 = vunpack.c.h.b16 %v299
        %v592 = vunpack.c.l.b16 %v300
        %v593 = vunpack.c.h.b16 %v300
        %v594 = vunpack.c.l.b16 %v301
        %v595 = vunpack.c.h.b16 %v301
        %v596 = vunpack.c.l.b16 %v302
        %v597 = vunpack.c.h.b16 %v302
        %v598 = vunpack.c.l.b16 %v303
        %v599 = vunpack.c.h.b16 %v303
        %v600 = vunpack.c.l.b16 %v304
        %v601 = vunpack.c.h.b16 %v304
        %v602 = vunpack.c.l.b16 %v305
        %v603 = vunpack.c.h.b16 %v305
        %v604 = vunpack.c.l.b16 %v306
        %v605 = vunpack.c.h.b16 %v306
        %v606 = vunpack.c.l.b16 %v307
        %v607 = vunpack.c.h.b16 %v307
        %v608 = vunpack.c.l.b16 %v308
        %v609 = vunpack.c.h.b16 %v308
        %v610 = vunpack.c.l.b16 %v309
        %v611 = vunpack.c.h.b16 %v309
        %v612 = vunpack.c.l.b16 %v310
        %v613 = vunpack.c.h.b16 %v310
        %v614 = vunpack.c.l.b16 %v311
        %v615 = vunpack.c.h.b16 %v311
        %v616 = vunpack.c.l.b16 %v312
        %v617 = vunpack.c.h.b16 %v312
        %v618 = vunpack.c.l.b16 %v313
        %v619 = vunpack.c.h.b16 %v313
        %v620 = vunpack.c.l.b16 %v314
        %v621 = vunpack.c.h.b16 %v314
        %v622 = vunpack.c.l.b16 %v315
        %v623 = vunpack.c.h.b16 %v315
        %v624 = vunpack.c.l.b16 %v316
        %v625 = vunpack.c.h.b16 %v316
        %v626 = vunpack.c.l.b16 %v317
        %v627 = vunpack.c.h.b16 %v317
        %v628 = vunpack.c.l.b16 %v318
        %v629 = vunpack.c.h.b16 %v318
        %v630 = vunpack.c.l.b16 %v319
        %v631 = vunpack.c.h.b16 %v319
        %v632 = vunpack.c.l.b16 %v320
        %v633 = vunpack.c.h.b16 %v320
        %v634 = vunpack.c.l.b16 %v321
        %v635 = vunpack.c.h.b16 %v321
        %v636 = vunpack.c.l.b16 %v322
        %v637 = vunpack.c.h.b16 %v322
        %v638 = vunpack.c.l.b16 %v323
        %v639 = vunpack.c.h.b16 %v323
        %v640 = vunpack.c.l.b16 %v324
        %v641 = vunpack.c.h.b16 %v324
        %v642 = vunpack.c.l.b16 %v325
        %v643 = vunpack.c.h.b16 %v325
        %v644 = vunpack.c.l.b16 %v326
        %v645 = vunpack.c.h.b16 %v326
        %v646 = vunpack.c.l.b16 %v327
        %v647 = vunpack.c.h.b16 %v327
        %v648 = vunpack.c.l.b16 %v328
        %v649 = vunpack.c.h.b16 %v328
        %v650 = vunpack.c.l.b16 %v329
        %v651 = vunpack.c.h.b16 %v329
        %v652 = vunpack.c.l.b16 %v330
        %v653 = vunpack.c.h.b16 %v330
        %v654 = vunpack.c.l.b16 %v331
        %v655 = vunpack.c.h.b16 %v331
        %v656 = vunpack.c.l.b16 %v332
        %v657 = vunpack.c.h.b16 %v332
        %v658 = vunpack.c.l.b16 %v333
        %v659 = vunpack.c.h.b16 %v333
        %v660 = vunpack.c.l.b16 %v334
        %v661 = vunpack.c.h.b16 %v334
        %v662 = vunpack.c.l.b16 %v335
        %v663 = vunpack.c.h.b16 %v335
        %v664 = vunpack.c.l.b16 %v336
        %v665 = vunpack.c.h.b16 %v336
        %v666 = vunpack.c.l.b16 %v337
        %v667 = vunpack.c.h.b16 %v337
        %v668 = vunpack.c.l.b16 %v338
        %v669 = vunpack.c.h.b16 %v338
        %v670 = vunpack.c.l.b16 %v339
        %v671 = vunpack.c.h.b16 %v339
        %v672 = vunpack.c.l.b16 %v340
        %v673 = vunpack.c.h.b16 %v340
        %v674 = vunpack.c.l.b16 %v341
        %v675 = vunpack.c.h.b16 %v341
        %v676 = vunpack.c.l.b16 %v342
        %v677 = vunpack.c.h.b16 %v342
        %v678 = vunpack.c.l.b16 %v343
        %v679 = vunpack.c.h.b16 %v343
        %v680 = vunpack.c.l.b16 %v344
        %v681 = vunpack.c.h.b16 %v344
        %v682 = vunpack.c.l.b16 %v345
        %v683 = vunpack.c.h.b16 %v345
        %v684 = vunpack.c.l.b16 %v346
        %v685 = vunpack.c.h.b16 %v346
        %v686 = vunpack.c.l.b16 %v347
        %v687 = vunpack.c.h.b16 %v347
        %v688 = vunpack.c.l.b16 %v348
        %v689 = vunpack.c.h.b16 %v348
        %v690 = vunpack.c.l.b16 %v349
        %v691 = vunpack.c.h.b16 %v349
        %v692 = vunpack.c.l.b16 %v350
        %v693 = vunpack.c.h.b16 %v350
        %v694 = vunpack.c.l.b16 %v351
        %v695 = vunpack.c.h.b16 %v351
        %v696 = vunpack.c.l.b16 %v352
        %v697 = vunpack.c.h.b16 %v352
        %v698 = vunpack.c.l.b16 %v353
        %v699 = vunpack.c.h.b16 %v353
        %v700 = vunpack.c.l.b16 %v354
        %v701 = vunpack.c.h.b16 %v354
        %v702 = vunpack.c.l.b16 %v355
        %v703 = vunpack.c.h.b16 %v355
        %v704 = vunpack.c.l.b16 %v356
        %v705 = vunpack.c.h.b16 %v356
        %v706 = vunpack.c.l.b16 %v357
        %v707 = vunpack.c.h.b16 %v357
        %v708 = vunpack.c.l.b16 %v358
        %v709 = vunpack.c.h.b16 %v358
        %v710 = vunpack.c.l.b16 %v359
        %v711 = vunpack.c.h.b16 %v359
        %v712 = vunpack.c.l.b16 %v360
        %v713 = vunpack.c.h.b16 %v360
        %v714 = vunpack.c.l.b16 %v361
        %v715 = vunpack.c.h.b16 %v361
        %v716 = vunpack.c.l.b16 %v362
        %v717 = vunpack.c.h.b16 %v362
        %v718 = vunpack.c.l.b16 %v363
        %v719 = vunpack.c.h.b16 %v363
        %v720 = vunpack.c.l.b16 %v364
        %v721 = vunpack.c.h.b16 %v364
        %v722 = vunpack.c.l.b16 %v365
        %v723 = vunpack.c.h.b16 %v365
        %v724 = vunpack.c.l.b16 %v366
        %v725 = vunpack.c.h.b16 %v366
        %v726 = vunpack.c.l.b16 %v367
        %v727 = vunpack.c.h.b16 %v367
        %v728 = vunpack.c.l.b16 %v368
        %v729 = vunpack.c.h.b16 %v368
        %v730 = vunpack.c.l.b16 %v369
        %v731 = vunpack.c.h.b16 %v369
        %v732 = vunpack.c.l.b16 %v370
        %v733 = vunpack.c.h.b16 %v370
        %v734 = vunpack.c.l.b16 %v371
        %v735 = vunpack.c.h.b16 %v371
        %v736 = vunpack.c.l.b16 %v372
        %v737 = vunpack.c.h.b16 %v372
        %v738 = vunpack.c.l.b16 %v373
        %v739 = vunpack.c.h.b16 %v373
        %v740 = vunpack.c.l.b16 %v374
        %v741 = vunpack.c.h.b16 %v374
        %v742 = vunpack.c.l.b16 %v375
        %v743 = vunpack.c.h.b16 %v375
        %v744 = vunpack.c.l.b16 %v376
        %v745 = vunpack.c.h.b16 %v376
        %v746 = vunpack.c.l.b16 %v377
        %v747 = vunpack.c.h.b16 %v377
        %v748 = vunpack.c.l.b16 %v378
        %v749 = vunpack.c.h.b16 %v378
        %v750 = vunpack.c.l.b16 %v379
        %v751 = vunpack.c.h.b16 %v379
        %v752 = vunpack.c.l.b16 %v380
        %v753 = vunpack.c.h.b16 %v380
        %v754 = vunpack.c.l.b16 %v381
        %v755 = vunpack.c.h.b16 %v381
        %v756 = vunpack.c.l.b16 %v382
        %v757 = vunpack.c.h.b16 %v382
        %v758 = vunpack.c.l.b16 %v383
        %v759 = vunpack.c.h.b16 %v383
        %v760 = vunpack.c.l.b16 %v384
        %v761 = vunpack.c.h.b16 %v384
        %v762 = vunpack.c.l.b16 %v385
        %v763 = vunpack.c.h.b16 %v385
        %v764 = vunpack.c.l.b16 %v386
        %v765 = vunpack.c.h.b16 %v386
        %v766 = vunpack.c.l.b16 %v387
        %v767 = vunpack.c.h.b16 %v387
        %v768 = vunpack.c.l.b16 %v388
        %v769 = vunpack.c.h.b16 %v388
        %v770 = vunpack.c.l.b16 %v389
        %v771 = vunpack.c.h.b16 %v389
        %v772 = vunpack.c.l.b16 %v390
        %v773 = vunpack.c.h.b16 %v390
        %v774 = vunpack.c.l.b16 %v391
        %v775 = vunpack.c.h.b16 %v391
        %v776 = vunpack.c.l.b16 %v392
        %v777 = vunpack.c.h.b16 %v392
        %v778 = vunpack.c.l.b16 %v393
        %v779 = vunpack.c.h.b16 %v393
        %v780 = vunpack.c.l.b16 %v394
        %v781 = vunpack.c.h.b16 %v394
        %v782 = vunpack.c.l.b16 %v395
        %v783 = vunpack.c.h.b16 %v395
        %v784 = vunpack.c.l.b16 %v396
        %v785 = vunpack.c.h.b16 %v396
        %v786 = vunpack.c.l.b16 %v397
        %v787 = vunpack.c.h.b16 %v397
        %v788 = vunpack.c.l.b16 %v398
        %v789 = vunpack.c.h.b16 %v398
        %v790 = vunpack.c.l.b16 %v399
        %v791 = vunpack.c.h.b16 %v399
        %v792 = vunpack.c.l.b16 %v400
        %v793 = vunpack.c.h.b16 %v400
        %v794 = vunpack.c.l.b16 %v401
        %v795 = vunpack.c.h.b16 %v401
        %v796 = vunpack.c.l.b16 %v402
        %v797 = vunpack.c.h.b16 %v402
        %v798 = vunpack.c.l.b16 %v403
        %v799 = vunpack.c.h.b16 %v403
        %v800 = vunpack.c.l.b16 %v404
        %v801 = vunpack.c.h.b16 %v404
        %v802 = vunpack.c.l.b16 %v405
        %v803 = vunpack.c.h.b16 %v405
        %v804 = vunpack.c.l.b16 %v406
        %v805 = vunpack.c.h.b16 %v406
        %v806 = vunpack.c.l.b16 %v407
        %v807 = vunpack.c.h.b16 %v407
        %v808 = vunpack.c.l.b16 %v408
        %v809 = vunpack.c.h.b16 %v408
        %v810 = vunpack.c.l.b16 %v409
        %v811 = vunpack.c.h.b16 %v409
        %v812 = vunpack.c.l.b16 %v410
        %v813 = vunpack.c.h.b16 %v410
        %v814 = vunpack.c.l.b16 %v411
        %v815 = vunpack.c.h.b16 %v411
        %v816 = vunpack.c.l.b16 %v412
        %v817 = vunpack.c.h.b16 %v412
        %v818 = vunpack.c.l.b16 %v413
        %v819 = vunpack.c.h.b16 %v413
        %v820 = vunpack.c.l.b16 %v414
        %v821 = vunpack.c.h.b16 %v414
        %v822 = vunpack.c.l.b16 %v415
        %v823 = vunpack.c.h.b16 %v415
        %v824 = vunpack.c.l.b16 %v416
        %v825 = vunpack.c.h.b16 %v416
        %v826 = vunpack.c.l.b16 %v417
        %v827 = vunpack.c.h.b16 %v417
        %v828 = vunpack.c.l.b16 %v418
        %v829 = vunpack.c.h.b16 %v418
        %v830 = vunpack.c.l.b16 %v419
        %v831 = vunpack.c.h.b16 %v419
        %v832 = vunpack.c.l.b16 %v420
        %v833 = vunpack.c.h.b16 %v420
        %v834 = vpack.c.b16 %v582, %v578
        %v835 = vpack.c.b16 %v583, %v579
        %v836 = vpack.c.b16 %v584, %v580
        %v837 = vpack.c.b16 %v585, %v581
        %v838 = vpack.c.b16 %v590, %v586
        %v839 = vpack.c.b16 %v591, %v587
        %v840 = vpack.c.b16 %v592, %v588
        %v841 = vpack.c.b16 %v593, %v589
        %v842 = vpack.c.b16 %v598, %v594
        %v843 = vpack.c.b16 %v599, %v595
        %v844 = vpack.c.b16 %v600, %v596
        %v845 = vpack.c.b16 %v601, %v597
        %v846 = vpack.c.b16 %v606, %v602
        %v847 = vpack.c.b16 %v607, %v603
        %v848 = vpack.c.b16 %v608, %v604
        %v849 = vpack.c.b16 %v609, %v605
        %v850 = vpack.c.b16 %v614, %v610
        %v851 = vpack.c.b16 %v615, %v611
        %v852 = vpack.c.b16 %v616, %v612
        %v853 = vpack.c.b16 %v617, %v613
        %v854 = vpack.c.b16 %v622, %v618
        %v855 = vpack.c.b16 %v623, %v619
        %v856 = vpack.c.b16 %v624, %v620
        %v857 = vpack.c.b16 %v625, %v621
        %v858 = vpack.c.b16 %v630, %v626
        %v859 = vpack.c.b16 %v631, %v627
        %v860 = vpack.c.b16 %v632, %v628
        %v861 = vpack.c.b16 %v633, %v629
        %v862 = vpack.c.b16 %v638, %v634
        %v863 = vpack.c.b16 %v639, %v635
        %v864 = vpack.c.b16 %v640, %v636
        %v865 = vpack.c.b16 %v641, %v637
        %v866 = vpack.c.b16 %v646, %v642
        %v867 = vpack.c.b16 %v647, %v643
        %v868 = vpack.c.b16 %v648, %v644
        %v869 = vpack.c.b16 %v649, %v645
        %v870 = vpack.c.b16 %v654, %v650
        %v871 = vpack.c.b16 %v655, %v651
        %v872 = vpack.c.b16 %v656, %v652
        %v873 = vpack.c.b16 %v657, %v653
        %v874 = vpack.c.b16 %v662, %v658
        %v875 = vpack.c.b16 %v663, %v659
        %v876 = vpack.c.b16 %v664, %v660
        %v877 = vpack.c.b16 %v665, %v661
        %v878 = vpack.c.b16 %v670, %v666
        %v879 = vpack.c.b16 %v671, %v667
        %v880 = vpack.c.b16 %v672, %v668
        %v881 = vpack.c.b16 %v673, %v669
        %v882 = vpack.c.b16 %v678, %v674
        %v883 = vpack.c.b16 %v679, %v675
        %v884 = vpack.c.b16 %v680, %v676
        %v885 = vpack.c.b16 %v681, %v677
        %v886 = vpack.c.b16 %v686, %v682
        %v887 = vpack.c.b16 %v687, %v683
        %v888 = vpack.c.b16 %v688, %v684
        %v889 = vpack.c.b16 %v689, %v685
        %v890 = vpack.c.b16 %v694, %v690
        %v891 = vpack.c.b16 %v695, %v691
        %v892 = vpack.c.b16 %v696, %v692
        %v893 = vpack.c.b16 %v697, %v693
        %v894 = vpack.c.b16 %v702, %v698
        %v895 = vpack.c.b16 %v703, %v699
        %v896 = vpack.c.b16 %v704, %v700
        %v897 = vpack.c.b16 %v705, %v701
        %v898 = vpack.c.b16 %v710, %v706
        %v899 = vpack.c.b16 %v711, %v707
        %v900 = vpack.c.b16 %v712, %v708
        %v901 = vpack.c.b16 %v713, %v709
        %v902 = vpack.c.b16 %v718, %v714
        %v903 = vpack.c.b16 %v719, %v715
        %v904 = vpack.c.b16 %v720, %v716
        %v905 = vpack.c.b16 %v721, %v717
        %v906 = vpack.c.b16 %v726, %v722
        %v907 = vpack.c.b16 %v727, %v723
        %v908 = vpack.c.b16 %v728, %v724
        %v909 = vpack.c.b16 %v729, %v725
        %v910 = vpack.c.b16 %v734, %v730
        %v911 = vpack.c.b16 %v735, %v731
        %v912 = vpack.c.b16 %v736, %v732
        %v913 = vpack.c.b16 %v737, %v733
        %v914 = vpack.c.b16 %v742, %v738
        %v915 = vpack.c.b16 %v743, %v739
        %v916 = vpack.c.b16 %v744, %v740
        %v917 = vpack.c.b16 %v745, %v741
        %v918 = vpack.c.b16 %v750, %v746
        %v919 = vpack.c.b16 %v751, %v747
        %v920 = vpack.c.b16 %v752, %v748
        %v921 = vpack.c.b16 %v753, %v749
        %v922 = vpack.c.b16 %v758, %v754
        %v923 = vpack.c.b16 %v759, %v755
        %v924 = vpack.c.b16 %v760, %v756
        %v925 = vpack.c.b16 %v761, %v757
        %v926 = vpack.c.b16 %v766, %v762
        %v927 = vpack.c.b16 %v767, %v763
        %v928 = vpack.c.b16 %v768, %v764
        %v929 = vpack.c.b16 %v769, %v765
        %v930 = vpack.c.b16 %v774, %v770
        %v931 = vpack.c.b16 %v775, %v771
        %v932 = vpack.c.b16 %v776, %v772
        %v933 = vpack.c.b16 %v777, %v773
        %v934 = vpack.c.b16 %v782, %v778
        %v935 = vpack.c.b16 %v783, %v779
        %v936 = vpack.c.b16 %v784, %v780
        %v937 = vpack.c.b16 %v785, %v781
        %v938 = vpack.c.b16 %v790, %v786
        %v939 = vpack.c.b16 %v791, %v787
        %v940 = vpack.c.b16 %v792, %v788
        %v941 = vpack.c.b16 %v793, %v789
        %v942 = vpack.c.b16 %v798, %v794
        %v943 = vpack.c.b16 %v799, %v795
        %v944 = vpack.c.b16 %v800, %v796
        %v945 = vpack.c.b16 %v801, %v797
        %v946 = vpack.c.b16 %v806, %v802
        %v947 = vpack.c.b16 %v807, %v803
        %v948 = vpack.c.b16 %v808, %v804
        %v949 = vpack.c.b16 %v809, %v805
        %v950 = vpack.c.b16 %v814, %v810
        %v951 = vpack.c.b16 %v815, %v811
        %v952 = vpack.c.b16 %v816, %v812
        %v953 = vpack.c.b16 %v817, %v813
        %v954 = vpack.c.b16 %v822, %v818
        %v955 = vpack.c.b16 %v823, %v819
        %v956 = vpack.c.b16 %v824, %v820
        %v957 = vpack.c.b16 %v825, %v821
        %v958 = vpack.c.b16 %v830, %v826
        %v959 = vpack.c.b16 %v831, %v827
        %v960 = vpack.c.b16 %v832, %v828
        %v961 = vpack.c.b16 %v833, %v829
        %1090 = vmatprep.subr.bf16.mxu0 %v835
        %1091 = vmatpush1.bf16.msra.mxu0 %v834
        %1092 = vmatprep.subr.bf16.mxu0 %v839
        %1093 = vmatpush1.bf16.msra.mxu0 %v838
        %1094 = vmatprep.subr.bf16.mxu0 %v843
        %1095 = vmatpush1.bf16.msra.mxu0 %v842
        %1096 = vmatprep.subr.bf16.mxu0 %v847
        %1097 = vmatpush1.bf16.msra.mxu0 %v846
        %1098 = vmatprep.subr.bf16.mxu0 %v851
        %1099 = vmatpush1.bf16.msra.mxu0 %v850
        %1100 = vmatprep.subr.bf16.mxu0 %v855
        %1101 = vmatpush1.bf16.msra.mxu0 %v854
        %1102 = vmatprep.subr.bf16.mxu0 %v859
        %1103 = vmatpush1.bf16.msra.mxu0 %v858
        %1104 = vmatprep.subr.bf16.mxu0 %v863
        %1105 = vmatpush1.bf16.msra.mxu0 %v862
        %1106 = vmatprep.subr.bf16.mxu0 %v867
        %1107 = vmatpush1.bf16.msra.mxu0 %v866
        %1108 = vmatprep.subr.bf16.mxu0 %v871
        %1109 = vmatpush1.bf16.msra.mxu0 %v870
        %1110 = vmatprep.subr.bf16.mxu0 %v875
        %1111 = vmatpush1.bf16.msra.mxu0 %v874
        %1112 = vmatprep.subr.bf16.mxu0 %v879
        %1113 = vmatpush1.bf16.msra.mxu0 %v878
        %1114 = vmatprep.subr.bf16.mxu0 %v883
        %1115 = vmatpush1.bf16.msra.mxu0 %v882
        %1116 = vmatprep.subr.bf16.mxu0 %v887
        %1117 = vmatpush1.bf16.msra.mxu0 %v886
        %1118 = vmatprep.subr.bf16.mxu0 %v891
        %1119 = vmatpush1.bf16.msra.mxu0 %v890
        %1120 = vmatprep.subr.bf16.mxu0 %v895
        %1121 = vmatpush1.bf16.msra.mxu0 %v894
        %1122 = vmatprep.mubr.bf16.mxu0 %v443
        %1123 = vmatmul.mubr.bf16.gmra.mrb[0].mxu0 %v436
        %v1124 = vpop.f32.mrb[0].mxu0
        %v1125 = vadd.f32 0.0, %v1124
        %v1126 = vpop.f32.mrb[0].mxu0
        %v1127 = vadd.f32 0.0, %v1126
        %v1128 = vpop.f32.mrb[0].mxu0
        %v1129 = vpop.f32.mrb[0].mxu0
        %1130 = vdwg.mxu0
        %1131 = vmatprep.subr.bf16.mxu0 %v899
        %1132 = vmatpush1.bf16.msra.mxu0 %v898
        %1133 = vmatprep.subr.bf16.mxu0 %v903
        %1134 = vmatpush1.bf16.msra.mxu0 %v902
        %1135 = vmatprep.subr.bf16.mxu0 %v907
        %1136 = vmatpush1.bf16.msra.mxu0 %v906
        %1137 = vmatprep.subr.bf16.mxu0 %v911
        %1138 = vmatpush1.bf16.msra.mxu0 %v910
        %1139 = vmatprep.subr.bf16.mxu0 %v915
        %1140 = vmatpush1.bf16.msra.mxu0 %v914
        %1141 = vmatprep.subr.bf16.mxu0 %v919
        %1142 = vmatpush1.bf16.msra.mxu0 %v918
        %1143 = vmatprep.subr.bf16.mxu0 %v923
        %1144 = vmatpush1.bf16.msra.mxu0 %v922
        %1145 = vmatprep.subr.bf16.mxu0 %v927
        %1146 = vmatpush1.bf16.msra.mxu0 %v926
        %1147 = vmatprep.subr.bf16.mxu0 %v931
        %1148 = vmatpush1.bf16.msra.mxu0 %v930
        %1149 = vmatprep.subr.bf16.mxu0 %v935
        %1150 = vmatpush1.bf16.msra.mxu0 %v934
        %1151 = vmatprep.subr.bf16.mxu0 %v939
        %1152 = vmatpush1.bf16.msra.mxu0 %v938
        %1153 = vmatprep.subr.bf16.mxu0 %v943
        %1154 = vmatpush1.bf16.msra.mxu0 %v942
        %1155 = vmatprep.subr.bf16.mxu0 %v947
        %1156 = vmatpush1.bf16.msra.mxu0 %v946
        %1157 = vmatprep.subr.bf16.mxu0 %v951
        %1158 = vmatpush1.bf16.msra.mxu0 %v950
        %1159 = vmatprep.subr.bf16.mxu0 %v955
        %1160 = vmatpush1.bf16.msra.mxu0 %v954
        %1161 = vmatprep.subr.bf16.mxu0 %v959
        %1162 = vmatpush1.bf16.msra.mxu0 %v958
        %1163 = vmatprep.mubr.bf16.mxu0 %v445
        %1164 = vmatmul.mubr.bf16.gmra.mrb[0].mxu0 %v444
        %v1165 = vpop.f32.mrb[0].mxu0
        %v1166 = vadd.f32 %v1125, %v1165
        %v1167 = vpop.f32.mrb[0].mxu0
        %v1168 = vadd.f32 %v1127, %v1167
        %v1169 = vpop.f32.mrb[0].mxu0
        %v1170 = vpop.f32.mrb[0].mxu0
        %1171 = vdwg.mxu0
        %1172 = vmatprep.subr.bf16.mxu0 %v837
        %1173 = vmatpush1.bf16.msra.mxu0 %v836
        %1174 = vmatprep.subr.bf16.mxu0 %v841
        %1175 = vmatpush1.bf16.msra.mxu0 %v840
        %1176 = vmatprep.subr.bf16.mxu0 %v845
        %1177 = vmatpush1.bf16.msra.mxu0 %v844
        %1178 = vmatprep.subr.bf16.mxu0 %v849
        %1179 = vmatpush1.bf16.msra.mxu0 %v848
        %1180 = vmatprep.subr.bf16.mxu0 %v853
        %1181 = vmatpush1.bf16.msra.mxu0 %v852
        %1182 = vmatprep.subr.bf16.mxu0 %v857
        %1183 = vmatpush1.bf16.msra.mxu0 %v856
        %1184 = vmatprep.subr.bf16.mxu0 %v861
        %1185 = vmatpush1.bf16.msra.mxu0 %v860
        %1186 = vmatprep.subr.bf16.mxu0 %v865
        %1187 = vmatpush1.bf16.msra.mxu0 %v864
        %1188 = vmatprep.subr.bf16.mxu0 %v869
        %1189 = vmatpush1.bf16.msra.mxu0 %v868
        %1190 = vmatprep.subr.bf16.mxu0 %v873
        %1191 = vmatpush1.bf16.msra.mxu0 %v872
        %1192 = vmatprep.subr.bf16.mxu0 %v877
        %1193 = vmatpush1.bf16.msra.mxu0 %v876
        %1194 = vmatprep.subr.bf16.mxu0 %v881
        %1195 = vmatpush1.bf16.msra.mxu0 %v880
        %1196 = vmatprep.subr.bf16.mxu0 %v885
        %1197 = vmatpush1.bf16.msra.mxu0 %v884
        %1198 = vmatprep.subr.bf16.mxu0 %v889
        %1199 = vmatpush1.bf16.msra.mxu0 %v888
        %1200 = vmatprep.subr.bf16.mxu0 %v893
        %1201 = vmatpush1.bf16.msra.mxu0 %v892
        %1202 = vmatprep.subr.bf16.mxu0 %v897
        %1203 = vmatpush1.bf16.msra.mxu0 %v896
        %1204 = vmatprep.mubr.bf16.mxu0 %v443
        %1205 = vmatmul.mubr.bf16.gmra.mrb[0].mxu0 %v436
        %v1206 = vpop.f32.mrb[0].mxu0
        %v1207 = vadd.f32 0.0, %v1206
        %v1208 = vpop.f32.mrb[0].mxu0
        %v1209 = vadd.f32 0.0, %v1208
        %v1210 = vpop.f32.mrb[0].mxu0
        %v1211 = vpop.f32.mrb[0].mxu0
        %1212 = vdwg.mxu0
        %1213 = vmatprep.subr.bf16.mxu0 %v901
        %1214 = vmatpush1.bf16.msra.mxu0 %v900
        %1215 = vmatprep.subr.bf16.mxu0 %v905
        %1216 = vmatpush1.bf16.msra.mxu0 %v904
        %1217 = vmatprep.subr.bf16.mxu0 %v909
        %1218 = vmatpush1.bf16.msra.mxu0 %v908
        %1219 = vmatprep.subr.bf16.mxu0 %v913
        %1220 = vmatpush1.bf16.msra.mxu0 %v912
        %1221 = vmatprep.subr.bf16.mxu0 %v917
        %1222 = vmatpush1.bf16.msra.mxu0 %v916
        %1223 = vmatprep.subr.bf16.mxu0 %v921
        %1224 = vmatpush1.bf16.msra.mxu0 %v920
        %1225 = vmatprep.subr.bf16.mxu0 %v925
        %1226 = vmatpush1.bf16.msra.mxu0 %v924
        %1227 = vmatprep.subr.bf16.mxu0 %v929
        %1228 = vmatpush1.bf16.msra.mxu0 %v928
        %1229 = vmatprep.subr.bf16.mxu0 %v933
        %1230 = vmatpush1.bf16.msra.mxu0 %v932
        %1231 = vmatprep.subr.bf16.mxu0 %v937
        %1232 = vmatpush1.bf16.msra.mxu0 %v936
        %1233 = vmatprep.subr.bf16.mxu0 %v941
        %1234 = vmatpush1.bf16.msra.mxu0 %v940
        %1235 = vmatprep.subr.bf16.mxu0 %v945
        %1236 = vmatpush1.bf16.msra.mxu0 %v944
        %1237 = vmatprep.subr.bf16.mxu0 %v949
        %1238 = vmatpush1.bf16.msra.mxu0 %v948
        %1239 = vmatprep.subr.bf16.mxu0 %v953
        %1240 = vmatpush1.bf16.msra.mxu0 %v952
        %1241 = vmatprep.subr.bf16.mxu0 %v957
        %1242 = vmatpush1.bf16.msra.mxu0 %v956
        %1243 = vmatprep.subr.bf16.mxu0 %v961
        %1244 = vmatpush1.bf16.msra.mxu0 %v960
        %1245 = vmatprep.mubr.bf16.mxu0 %v445
        %1246 = vmatmul.mubr.bf16.gmra.mrb[0].mxu0 %v444
        %v1247 = vpop.f32.mrb[0].mxu0
        %v1248 = vadd.f32 %v1207, %v1247
        %v1249 = vpop.f32.mrb[0].mxu0
        %v1250 = vadd.f32 %v1209, %v1249
        %v1251 = vpop.f32.mrb[0].mxu0
        %v1252 = vpop.f32.mrb[0].mxu0
        %1253 = vdwg.mxu0
        %v1258 = vcombine.low %v1166, %v1168
        %v1259 = vcombine.low %v1248, %v1250
        %v1261 = vunpack.c.l.s4 1983009808
        %v1262 = vunpack.c.0.s8 %v1261
        %v1263 = vlaneseq
        %v1264 = vshrl.u32 %v1263, 7
        %v1265 = vsub.s32 %v1262, %v1264
        %v1266 = vrot.slane %v1258, %v1265
        %v1268 = vunpack.c.l.s4 1983009808
        %v1269 = vunpack.c.0.s8 %v1268
        %v1270 = vlaneseq
        %v1271 = vshrl.u32 %v1270, 7
        %v1272 = vsub.s32 %v1269, %v1271
        %v1273 = vrot.slane %v1259, %v1272
        %v1274 = vcombine.low %v1266, %v1273
        %v1276 = vadd.f32 %v291, %v1274
        %1277 = vst [vmem:[#allocation2] sm:$0xff] %v1276
        %p1278 = scmp.eq.s32.totalorder %s23, 1
        // Predicated region
        $region57: #{tpu_custom_call.1} parent=39 // pred_check
          %p1279 = pneg %p1278
        $region58: #{tpu_custom_call.1} parent=39 // pred_check_branch
          %1281 = sbr.rel (%p1279) target = $region60
        $region59: #{tpu_custom_call.1} parent=39 // pred_region
          %v1282 = vld [vmem:[#allocation2] sm:$0xff]
          %v1283 = vld [vmem:[%s2] sm:$0xf]
          %v1285 = vlaneseq
          %v1286 = vshrl.u32 %v1285, 7
          %v1287 = vsub.s32 0, %v1286
          %v1288 = vrot.slane %v1283, %v1287
          %v1289 = vlaneseq
          %v1290 = vshrl.u32 %v1289, 7
          %v1291 = vsub.s32 1, %v1290
          %v1292 = vrot.slane %v1283, %v1291
          %v1293 = vlaneseq
          %v1294 = vshrl.u32 %v1293, 7
          %v1295 = vsub.s32 2, %v1294
          %v1296 = vrot.slane %v1283, %v1295
          %v1297 = vlaneseq
          %v1298 = vshrl.u32 %v1297, 7
          %v1299 = vsub.s32 3, %v1298
          %v1300 = vrot.slane %v1283, %v1299
          %v1301 = vcombine.low %v1288, %v1292
          %v1302 = vcombine.low %v1296, %v1300
          %v1304 = vunpack.c.l.s4 1983009808
          %v1305 = vunpack.c.0.s8 %v1304
          %v1306 = vlaneseq
          %v1307 = vshrl.u32 %v1306, 7
          %v1308 = vsub.s32 %v1305, %v1307
          %v1309 = vrot.slane %v1301, %v1308
          %v1311 = vunpack.c.l.s4 1983009808
          %v1312 = vunpack.c.0.s8 %v1311
          %v1313 = vlaneseq
          %v1314 = vshrl.u32 %v1313, 7
          %v1315 = vsub.s32 %v1312, %v1314
          %v1316 = vrot.slane %v1302, %v1315
          %v1317 = vcombine.low %v1309, %v1316
          %v1319 = vadd.f32 %v1282, %v1317
          %v1320 = vld [vmem:[#allocation8] sm:$0xff]
          %v1321 = vld [vmem:[#allocation8 + $0x8] sm:$0xff]
          %v1322 = vld [vmem:[#allocation8 + $0x10] sm:$0xff]
          %v1323 = vld [vmem:[#allocation8 + $0x18] sm:$0xff]
          %v1324 = vld [vmem:[#allocation8 + $0x20] sm:$0xff]
          %v1325 = vld [vmem:[#allocation8 + $0x28] sm:$0xff]
          %v1326 = vld [vmem:[#allocation8 + $0x30] sm:$0xff]
          %v1327 = vld [vmem:[#allocation8 + $0x38] sm:$0xff]
          %v1328 = vld [vmem:[#allocation8 + $0x40] sm:$0xff]
          %v1329 = vld [vmem:[#allocation8 + $0x48] sm:$0xff]
          %v1330 = vld [vmem:[#allocation8 + $0x50] sm:$0xff]
          %v1331 = vld [vmem:[#allocation8 + $0x58] sm:$0xff]
          %v1332 = vld [vmem:[#allocation8 + $0x60] sm:$0xff]
          %v1333 = vld [vmem:[#allocation8 + $0x68] sm:$0xff]
          %v1334 = vld [vmem:[#allocation8 + $0x70] sm:$0xff]
          %v1335 = vld [vmem:[#allocation8 + $0x78] sm:$0xff]
          %v1336 = vld [vmem:[#allocation8 + $0x80] sm:$0xff]
          %v1337 = vld [vmem:[#allocation8 + $0x88] sm:$0xff]
          %v1338 = vld [vmem:[#allocation8 + $0x90] sm:$0xff]
          %v1339 = vld [vmem:[#allocation8 + $0x98] sm:$0xff]
          %v1340 = vld [vmem:[#allocation8 + $0xa0] sm:$0xff]
          %v1341 = vld [vmem:[#allocation8 + $0xa8] sm:$0xff]
          %v1342 = vld [vmem:[#allocation8 + $0xb0] sm:$0xff]
          %v1343 = vld [vmem:[#allocation8 + $0xb8] sm:$0xff]
          %v1344 = vld [vmem:[#allocation8 + $0xc0] sm:$0xff]
          %v1345 = vld [vmem:[#allocation8 + $0xc8] sm:$0xff]
          %v1346 = vld [vmem:[#allocation8 + $0xd0] sm:$0xff]
          %v1347 = vld [vmem:[#allocation8 + $0xd8] sm:$0xff]
          %v1348 = vld [vmem:[#allocation8 + $0xe0] sm:$0xff]
          %v1349 = vld [vmem:[#allocation8 + $0xe8] sm:$0xff]
          %v1350 = vld [vmem:[#allocation8 + $0xf0] sm:$0xff]
          %v1351 = vld [vmem:[#allocation8 + $0xf8] sm:$0xff]
          %v1352 = vld [vmem:[#allocation8 + $0x100] sm:$0xff]
          %v1353 = vld [vmem:[#allocation8 + $0x108] sm:$0xff]
          %v1354 = vld [vmem:[#allocation8 + $0x110] sm:$0xff]
          %v1355 = vld [vmem:[#allocation8 + $0x118] sm:$0xff]
          %v1356 = vld [vmem:[#allocation8 + $0x120] sm:$0xff]
          %v1357 = vld [vmem:[#allocation8 + $0x128] sm:$0xff]
          %v1358 = vld [vmem:[#allocation8 + $0x130] sm:$0xff]
          %v1359 = vld [vmem:[#allocation8 + $0x138] sm:$0xff]
          %v1360 = vld [vmem:[#allocation8 + $0x140] sm:$0xff]
          %v1361 = vld [vmem:[#allocation8 + $0x148] sm:$0xff]
          %v1362 = vld [vmem:[#allocation8 + $0x150] sm:$0xff]
          %v1363 = vld [vmem:[#allocation8 + $0x158] sm:$0xff]
          %v1364 = vld [vmem:[#allocation8 + $0x160] sm:$0xff]
          %v1365 = vld [vmem:[#allocation8 + $0x168] sm:$0xff]
          %v1366 = vld [vmem:[#allocation8 + $0x170] sm:$0xff]
          %v1367 = vld [vmem:[#allocation8 + $0x178] sm:$0xff]
          %v1368 = vld [vmem:[#allocation8 + $0x180] sm:$0xff]
          %v1369 = vld [vmem:[#allocation8 + $0x188] sm:$0xff]
          %v1370 = vld [vmem:[#allocation8 + $0x190] sm:$0xff]
          %v1371 = vld [vmem:[#allocation8 + $0x198] sm:$0xff]
          %v1372 = vld [vmem:[#allocation8 + $0x1a0] sm:$0xff]
          %v1373 = vld [vmem:[#allocation8 + $0x1a8] sm:$0xff]
          %v1374 = vld [vmem:[#allocation8 + $0x1b0] sm:$0xff]
          %v1375 = vld [vmem:[#allocation8 + $0x1b8] sm:$0xff]
          %v1376 = vld [vmem:[#allocation8 + $0x1c0] sm:$0xff]
          %v1377 = vld [vmem:[#allocation8 + $0x1c8] sm:$0xff]
          %v1378 = vld [vmem:[#allocation8 + $0x1d0] sm:$0xff]
          %v1379 = vld [vmem:[#allocation8 + $0x1d8] sm:$0xff]
          %v1380 = vld [vmem:[#allocation8 + $0x1e0] sm:$0xff]
          %v1381 = vld [vmem:[#allocation8 + $0x1e8] sm:$0xff]
          %v1382 = vld [vmem:[#allocation8 + $0x1f0] sm:$0xff]
          %v1383 = vld [vmem:[#allocation8 + $0x1f8] sm:$0xff]
          %v1384 = vld [vmem:[%s4] sm:$0x1]
          %v1386 = vlaneseq
          %v1387 = vshrl.u32 %v1386, 7
          %v1388 = vsub.s32 0, %v1387
          %v1389 = vrot.slane %v1384, %v1388
          %v1392 = vcombine.high %v1319, %v1319
          %v1394 = vunpack.c.l.s4 1983009808
          %v1395 = vunpack.c.0.s8 %v1394
          %v1396 = vlaneseq
          %v1397 = vshrl.u32 %v1396, 7
          %v1398 = vsub.s32 %v1395, %v1397
          %v1399 = vrot.slane %v1319, %v1398
          %v1401 = vunpack.c.l.s4 1983009808
          %v1402 = vunpack.c.0.s8 %v1401
          %v1403 = vlaneseq
          %v1404 = vshrl.u32 %v1403, 7
          %v1405 = vsub.s32 %v1402, %v1404
          %v1406 = vrot.slane %v1392, %v1405
          %v1407 = vcombine.high %v1399, %v1399
          %v1408 = vcombine.high %v1406, %v1406
          %1413 = vmatprep.subr.mxu0 0.0
          %1414 = vmatpush1.msra.mxu0 %v1320
          %1415 = vmatprep.subr.mxu0 0.0
          %1416 = vmatpush1.msra.mxu0 %v1321
          %1417 = vmatprep.subr.mxu0 0.0
          %1418 = vmatpush1.msra.mxu0 %v1322
          %1419 = vmatprep.subr.mxu0 0.0
          %1420 = vmatpush1.msra.mxu0 %v1323
          %1421 = vmatprep.subr.mxu0 0.0
          %1422 = vmatpush1.msra.mxu0 %v1324
          %1423 = vmatprep.subr.mxu0 0.0
          %1424 = vmatpush1.msra.mxu0 %v1325
          %1425 = vmatprep.subr.mxu0 0.0
          %1426 = vmatpush1.msra.mxu0 %v1326
          %1427 = vmatprep.subr.mxu0 0.0
          %1428 = vmatpush1.msra.mxu0 %v1327
          %1429 = vmatprep.subr.mxu0 0.0
          %1430 = vmatpush1.msra.mxu0 %v1328
          %1431 = vmatprep.subr.mxu0 0.0
          %1432 = vmatpush1.msra.mxu0 %v1329
          %1433 = vmatprep.subr.mxu0 0.0
          %1434 = vmatpush1.msra.mxu0 %v1330
          %1435 = vmatprep.subr.mxu0 0.0
          %1436 = vmatpush1.msra.mxu0 %v1331
          %1437 = vmatprep.subr.mxu0 0.0
          %1438 = vmatpush1.msra.mxu0 %v1332
          %1439 = vmatprep.subr.mxu0 0.0
          %1440 = vmatpush1.msra.mxu0 %v1333
          %1441 = vmatprep.subr.mxu0 0.0
          %1442 = vmatpush1.msra.mxu0 %v1334
          %1443 = vmatprep.subr.mxu0 0.0
          %1444 = vmatpush1.msra.mxu0 %v1335
          %1445 = vmatprep.subr.mxu0 0.0
          %1446 = vmatpush1.msra.mxu0 %v1336
          %1447 = vmatprep.subr.mxu0 0.0
          %1448 = vmatpush1.msra.mxu0 %v1337
          %1449 = vmatprep.subr.mxu0 0.0
          %1450 = vmatpush1.msra.mxu0 %v1338
          %1451 = vmatprep.subr.mxu0 0.0
          %1452 = vmatpush1.msra.mxu0 %v1339
          %1453 = vmatprep.subr.mxu0 0.0
          %1454 = vmatpush1.msra.mxu0 %v1340
          %1455 = vmatprep.subr.mxu0 0.0
          %1456 = vmatpush1.msra.mxu0 %v1341
          %1457 = vmatprep.subr.mxu0 0.0
          %1458 = vmatpush1.msra.mxu0 %v1342
          %1459 = vmatprep.subr.mxu0 0.0
          %1460 = vmatpush1.msra.mxu0 %v1343
          %1461 = vmatprep.subr.mxu0 0.0
          %1462 = vmatpush1.msra.mxu0 %v1344
          %1463 = vmatprep.subr.mxu0 0.0
          %1464 = vmatpush1.msra.mxu0 %v1345
          %1465 = vmatprep.subr.mxu0 0.0
          %1466 = vmatpush1.msra.mxu0 %v1346
          %1467 = vmatprep.subr.mxu0 0.0
          %1468 = vmatpush1.msra.mxu0 %v1347
          %1469 = vmatprep.subr.mxu0 0.0
          %1470 = vmatpush1.msra.mxu0 %v1348
          %1471 = vmatprep.subr.mxu0 0.0
          %1472 = vmatpush1.msra.mxu0 %v1349
          %1473 = vmatprep.subr.mxu0 0.0
          %1474 = vmatpush1.msra.mxu0 %v1350
          %1475 = vmatprep.subr.mxu0 0.0
          %1476 = vmatpush1.msra.mxu0 %v1351
          %1477 = vmatprep.mubr.f32.mxu0 %v1407
          %1478 = vmatmul.mubr.f32.gmra.mrb[0].mxu0 %v1399
          %v1479 = vpop.f32.mrb[0].mxu0
          %v1480 = vadd.f32 %v1389, %v1479
          %v1481 = vpop.f32.mrb[0].mxu0
          %1482 = vdwg.mxu0
          %1483 = vmatprep.subr.mxu0 0.0
          %1484 = vmatpush1.msra.mxu0 %v1352
          %1485 = vmatprep.subr.mxu0 0.0
          %1486 = vmatpush1.msra.mxu0 %v1353
          %1487 = vmatprep.subr.mxu0 0.0
          %1488 = vmatpush1.msra.mxu0 %v1354
          %1489 = vmatprep.subr.mxu0 0.0
          %1490 = vmatpush1.msra.mxu0 %v1355
          %1491 = vmatprep.subr.mxu0 0.0
          %1492 = vmatpush1.msra.mxu0 %v1356
          %1493 = vmatprep.subr.mxu0 0.0
          %1494 = vmatpush1.msra.mxu0 %v1357
          %1495 = vmatprep.subr.mxu0 0.0
          %1496 = vmatpush1.msra.mxu0 %v1358
          %1497 = vmatprep.subr.mxu0 0.0
          %1498 = vmatpush1.msra.mxu0 %v1359
          %1499 = vmatprep.subr.mxu0 0.0
          %1500 = vmatpush1.msra.mxu0 %v1360
          %1501 = vmatprep.subr.mxu0 0.0
          %1502 = vmatpush1.msra.mxu0 %v1361
          %1503 = vmatprep.subr.mxu0 0.0
          %1504 = vmatpush1.msra.mxu0 %v1362
          %1505 = vmatprep.subr.mxu0 0.0
          %1506 = vmatpush1.msra.mxu0 %v1363
          %1507 = vmatprep.subr.mxu0 0.0
          %1508 = vmatpush1.msra.mxu0 %v1364
          %1509 = vmatprep.subr.mxu0 0.0
          %1510 = vmatpush1.msra.mxu0 %v1365
          %1511 = vmatprep.subr.mxu0 0.0
          %1512 = vmatpush1.msra.mxu0 %v1366
          %1513 = vmatprep.subr.mxu0 0.0
          %1514 = vmatpush1.msra.mxu0 %v1367
          %1515 = vmatprep.subr.mxu0 0.0
          %1516 = vmatpush1.msra.mxu0 %v1368
          %1517 = vmatprep.subr.mxu0 0.0
          %1518 = vmatpush1.msra.mxu0 %v1369
          %1519 = vmatprep.subr.mxu0 0.0
          %1520 = vmatpush1.msra.mxu0 %v1370
          %1521 = vmatprep.subr.mxu0 0.0
          %1522 = vmatpush1.msra.mxu0 %v1371
          %1523 = vmatprep.subr.mxu0 0.0
          %1524 = vmatpush1.msra.mxu0 %v1372
          %1525 = vmatprep.subr.mxu0 0.0
          %1526 = vmatpush1.msra.mxu0 %v1373
          %1527 = vmatprep.subr.mxu0 0.0
          %1528 = vmatpush1.msra.mxu0 %v1374
          %1529 = vmatprep.subr.mxu0 0.0
          %1530 = vmatpush1.msra.mxu0 %v1375
          %1531 = vmatprep.subr.mxu0 0.0
          %1532 = vmatpush1.msra.mxu0 %v1376
          %1533 = vmatprep.subr.mxu0 0.0
          %1534 = vmatpush1.msra.mxu0 %v1377
          %1535 = vmatprep.subr.mxu0 0.0
          %1536 = vmatpush1.msra.mxu0 %v1378
          %1537 = vmatprep.subr.mxu0 0.0
          %1538 = vmatpush1.msra.mxu0 %v1379
          %1539 = vmatprep.subr.mxu0 0.0
          %1540 = vmatpush1.msra.mxu0 %v1380
          %1541 = vmatprep.subr.mxu0 0.0
          %1542 = vmatpush1.msra.mxu0 %v1381
          %1543 = vmatprep.subr.mxu0 0.0
          %1544 = vmatpush1.msra.mxu0 %v1382
          %1545 = vmatprep.subr.mxu0 0.0
          %1546 = vmatpush1.msra.mxu0 %v1383
          %1547 = vmatprep.mubr.f32.mxu0 %v1408
          %1548 = vmatmul.mubr.f32.gmra.mrb[0].mxu0 %v1406
          %v1549 = vpop.f32.mrb[0].mxu0
          %v1550 = vadd.f32 %v1480, %v1549
          %v1551 = vpop.f32.mrb[0].mxu0
          %1552 = vdwg.mxu0
          %1553 = vst [vmem:[#allocation9] sm:$0x3] %v1550
        $region60: #{tpu_custom_call.1} parent=39 // pred_fallthru
          _
        // Predicated region
        $region61: #{tpu_custom_call.1} parent=39 // pred_check
          %p1554 = pneg %p151
        $region62: #{tpu_custom_call.1} parent=39 // pred_check_branch
          %1556 = sbr.rel (%p1554) target = $region64
        $region63: #{tpu_custom_call.1} parent=39 // pred_region
          %s1558 = ssub.s32 32, 32
          %1559 = vsyncadd [#allocation5], %s1558
          %s1561 = sshll.u32 [#allocation9], 4
          %s1562 = int_to_ptr.vmem [resolvable:$true] %s1561
          %1564 = dma.vmem_to_hbm [thread:$0]  %s1562, 32, %s5, [#allocation5]
        $region64: #{tpu_custom_call.1} parent=39 // pred_fallthru
          _
        // Predicated region
        $region65: #{tpu_custom_call.1} parent=39 // pred_check
          %p1565 = pneg %p151
        $region66: #{tpu_custom_call.1} parent=39 // pred_check_branch
          %1567 = sbr.rel (%p1565) target = $region68
        $region67: #{tpu_custom_call.1} parent=39 // pred_region
          %1568 = dma.done [#allocation5], 32
        $region68: #{tpu_custom_call.1} parent=39 // pred_fallthru
          _
      $region40: #{tpu_custom_call.1} parent=5 // pred_fallthru
        _
      %p1569 = scmp.le.s32.totalorder 2, %s18
      // Predicated region
      $region69: #{tpu_custom_call.1} parent=5 // pred_check
        %p1570 = pneg %p1569
      $region70: #{tpu_custom_call.1} parent=5 // pred_check_branch
        %1572 = sbr.rel (%p1570) target = $region72
      $region71: #{tpu_custom_call.1} parent=5 // pred_region
        %s1573 = ssub.s32 %s18, 2
      $region72: #{tpu_custom_call.1} parent=5 // pred_fallthru
        _
    $region6: #{tpu_custom_call.1} parent=1 // loop_footer
      %s22 = sadd.s32 1, %s18
    $region7: #{tpu_custom_call.1} parent=1 // loop_footer_branch
      %17 = sbr.rel target = $region3
    $region8: #{tpu_custom_call.1} parent=1 // loop_exit
      _
    %1574 = vsyncpa [#allocation4], 1
    %s1575 = scalar_lea.sflag [#allocation4], 1
    %1576 = vsyncpa %s1575, 1
    %1577 = vsyncpa [#allocation7], 1
    %s1578 = scalar_lea.sflag [#allocation7], 1
    %1579 = vsyncpa %s1578, 1
    %1580 = vsyncpa [#allocation5], 1
    %s1581 = scalar_lea.sflag [#allocation5], 1
    %1582 = vsyncpa %s1581, 1

</llo_original>
